<compile_context>
chip_gen: v6e
topology: v6e:2x2x1
jax: 0.10.0
libtpu: 0.0.40
codegen_flags: <defaults>
</compile_context>

<pallas_src>
import functools

import jax
import jax.numpy as jnp
from jax.experimental import pallas as pl
from jax.experimental.pallas import tpu as pltpu

_LANE = 128        # vreg lane width; feature dims padded to multiples of this
_TILE_ROWS = 16    # batch-tile granularity (multiple of 8 f32 sublanes; 16 for bf16 packing)


def _round_up(n: int, m: int) -> int:
    return ((n + m - 1) // m) * m


def identity_mlp_kernel(x_ref, w1_ref, b1_ref, w2_ref, b2_ref, o_ref):
    # fc1: x @ W1 (MXU, bf16 inputs / f32 accumulation), bias + ReLU in f32 (VPU).
    x = x_ref[...].astype(w1_ref.dtype)
    h = jnp.dot(x, w1_ref[...], preferred_element_type=jnp.float32)
    h = jnp.maximum(h + b1_ref[...], 0.0)          # b1 is (1, D_h), broadcasts; f32 epilogue
    # fc2: h @ W2 — hidden activation never leaves vregs/VMEM.
    y = jnp.dot(h.astype(w2_ref.dtype), w2_ref[...], preferred_element_type=jnp.float32)
    o_ref[...] = (y + b2_ref[...]).astype(o_ref.dtype)


def prepare_identity_mlp_params(w1, b1, w2, b2, *, dot_dtype=jnp.bfloat16):
    """Pad feature dims to lane multiples and pre-cast weights ONCE (not per call).

    w1: (D_in, D_h), b1: (D_h,), w2: (D_h, D_out), b2: (D_out,).
    Returns ((w1_p, b1_p, w2_p, b2_p), d_out).
    """
    D_in, D_h = w1.shape
    D_out = w2.shape[1]
    d_in_p = _round_up(D_in, _LANE)
    d_h_p = _round_up(D_h, _LANE)
    d_out_p = _round_up(D_out, _LANE)

    # Zero padding is mathematically inert: zero input cols / zero weight
    # rows & cols / zero bias, and ReLU(0) = 0.
    w1_p = jnp.pad(w1, ((0, d_in_p - D_in), (0, d_h_p - D_h))).astype(dot_dtype)
    w2_p = jnp.pad(w2, ((0, d_h_p - D_h), (0, d_out_p - D_out))).astype(dot_dtype)
    b1_p = jnp.pad(b1, (0, d_h_p - D_h)).astype(jnp.float32).reshape(1, d_h_p)
    b2_p = jnp.pad(b2, (0, d_out_p - D_out)).astype(jnp.float32).reshape(1, d_out_p)
    return (w1_p, b1_p, w2_p, b2_p), D_out


@functools.partial(jax.jit, static_argnames=("d_out", "block_b"))
def identity_mlp(x, w1_p, b1_p, w2_p, b2_p, *, d_out, block_b: int = 512):
    """x: (B, D_in) f32.  w*_p / b*_p: pre-padded params from prepare_identity_mlp_params."""
    B, D_in = x.shape
    d_in_p, d_h_p = w1_p.shape
    d_out_p = w2_p.shape[1]

    # --- batch tiling ---------------------------------------------------------
    tb = min(block_b, _round_up(B, _TILE_ROWS))
    tb = max(_TILE_ROWS, _round_up(tb, _TILE_ROWS))
    b_p = _round_up(B, tb)
    # v7x has 2 TensorCores: make sure the "parallel" batch axis has >= 2 grid
    # steps whenever the batch is large enough to split.
    if b_p // tb < 2 and tb >= 2 * _TILE_ROWS:
        tb = _round_up(tb // 2, _TILE_ROWS)
        b_p = _round_up(B, tb)

    # Pad only x (cheap; weights are pre-padded), and only if needed.
    if b_p != B or d_in_p != D_in:
        x_p = jnp.pad(x, ((0, b_p - B), (0, d_in_p - D_in)))
    else:
        x_p = x

    grid = (b_p // tb,)
    itemsize_x = x.dtype.itemsize

    # --- VMEM budget: resident weights single-buffered, x/out double-buffered --
    vmem_needed = (
        w1_p.size * w1_p.dtype.itemsize + w2_p.size * w2_p.dtype.itemsize
        + b1_p.size * b1_p.dtype.itemsize + b2_p.size * b2_p.dtype.itemsize
        + 2 * tb * d_in_p * itemsize_x        # x tile (double-buffered)
        + 2 * tb * d_out_p * itemsize_x       # out tile (double-buffered)
        + tb * d_h_p * 4                      # f32 hidden activation
    )
    vmem_limit = int(min(max(int(vmem_needed * 1.3), 4 * 1024 * 1024),
                         64 * 1024 * 1024))
    # TODO(synk): for very large weights (W1+W2 beyond ~40-50 MiB, esp. v7x's
    # 64 MiB VMEM), add a D_h grid axis (tile W1 cols / W2 rows) with an f32
    # accumulator scratch + pl.when init/finalize instead of resident weights.

    cost = pl.CostEstimate(
        flops=2 * b_p * (d_in_p * d_h_p + d_h_p * d_out_p),
        transcendentals=0,
        bytes_accessed=(x_p.size * itemsize_x
                        + w1_p.size * w1_p.dtype.itemsize
                        + b1_p.size * b1_p.dtype.itemsize
                        + w2_p.size * w2_p.dtype.itemsize
                        + b2_p.size * b2_p.dtype.itemsize
                        + b_p * d_out_p * itemsize_x),
    )

    out_p = pl.pallas_call(
        identity_mlp_kernel,
        out_shape=jax.ShapeDtypeStruct((b_p, d_out_p), x.dtype),
        grid=grid,
        in_specs=[
            # x: tiled along batch; new tile every grid step (double-buffered).
            pl.BlockSpec((tb, d_in_p), lambda i: (i, 0)),
            # Weights / biases: constant index_map -> resident in VMEM; single-buffered.
            pl.BlockSpec((d_in_p, d_h_p), lambda i: (0, 0),
                         pipeline_mode=pl.Buffered(1)),
            pl.BlockSpec((1, d_h_p), lambda i: (0, 0),
                         pipeline_mode=pl.Buffered(1)),
            pl.BlockSpec((d_h_p, d_out_p), lambda i: (0, 0),
                         pipeline_mode=pl.Buffered(1)),
            pl.BlockSpec((1, d_out_p), lambda i: (0, 0),
                         pipeline_mode=pl.Buffered(1)),
        ],
        out_specs=pl.BlockSpec((tb, d_out_p), lambda i: (i, 0)),
        compiler_params=pltpu.CompilerParams(
            dimension_semantics=("parallel",),
            vmem_limit_bytes=vmem_limit),
        cost_estimate=cost,
    )(x_p, w1_p, b1_p, w2_p, b2_p)

    # Strip padding only where it exists (avoid an extra HBM pass when aligned).
    if b_p == B and d_out_p == d_out:
        return out_p
    if d_out_p == d_out:
        return out_p[:B]
    return out_p[:B, :d_out]


if __name__ == "__main__":
    # Small shapes consistent with the module: batch=8, input_dim=32,
    # hidden_dim=64, output_dim=16.
    B, D_in, D_h, D_out = 8, 32, 64, 16

    key = jax.random.PRNGKey(0)
    kx, kw1, kb1, kw2, kb2 = jax.random.split(key, 5)

    x = jax.random.normal(kx, (B, D_in), dtype=jnp.float32)

    # Deterministic init mirroring nn.Linear's uniform(-1/sqrt(fan_in), ...).
    bound1 = 1.0 / (D_in ** 0.5)
    bound2 = 1.0 / (D_h ** 0.5)
    # Stored already transposed relative to PyTorch: (in, out).
    w1 = jax.random.uniform(kw1, (D_in, D_h), jnp.float32, -bound1, bound1)
    b1 = jax.random.uniform(kb1, (D_h,), jnp.float32, -bound1, bound1)
    w2 = jax.random.uniform(kw2, (D_h, D_out), jnp.float32, -bound2, bound2)
    b2 = jax.random.uniform(kb2, (D_out,), jnp.float32, -bound2, bound2)

    # Reference in plain JAX (same math as the PyTorch forward).
    ref = jnp.maximum(x @ w1 + b1, 0.0) @ w2 + b2

    # f32 validation mode: tight tolerance.
    params_f32, d_out = prepare_identity_mlp_params(w1, b1, w2, b2,
                                                    dot_dtype=jnp.float32)
    out_f32 = jax.block_until_ready(identity_mlp(x, *params_f32, d_out=d_out))
    assert out_f32.shape == (B, D_out)
    assert jnp.allclose(out_f32, ref, atol=1e-5, rtol=1e-5)

    # Default bf16-MXU mode: relaxed tolerance (bf16 has ~8 mantissa bits).
    params_bf16, d_out = prepare_identity_mlp_params(w1, b1, w2, b2,
                                                     dot_dtype=jnp.bfloat16)
    out_bf16 = jax.block_until_ready(identity_mlp(x, *params_bf16, d_out=d_out))
    assert out_bf16.shape == (B, D_out)
    assert jnp.allclose(out_bf16, ref, atol=5e-2, rtol=5e-2)

    print("KERNEL_OK")
</pallas_src>

<mosaic_0001>
module attributes {stable_mosaic.version = 11 : i64} {
  func.func @identity_mlp_kernel(%arg0: i32, %arg1: memref<16x128xf32, #tpu.memory_space<vmem>>, %arg2: memref<128x128xf32, #tpu.memory_space<vmem>>, %arg3: memref<1x128xf32, #tpu.memory_space<vmem>>, %arg4: memref<128x128xf32, #tpu.memory_space<vmem>>, %arg5: memref<1x128xf32, #tpu.memory_space<vmem>>, %arg6: memref<16x128xf32, #tpu.memory_space<vmem>>) attributes {dimension_semantics = [#tpu.dimension_semantics<parallel>], iteration_bounds = array<i64: 1>, scalar_prefetch = 0 : i64, scratch_operands = 0 : i64, tpu.core_type = #tpu.core_type<tc>, window_params = [{transform_indices = @transform_0, window_bounds = array<i64: 16, 128>}, {pipeline_mode = #tpu.pipeline_mode<synchronous>, transform_indices = @transform_1, window_bounds = array<i64: 128, 128>}, {pipeline_mode = #tpu.pipeline_mode<synchronous>, transform_indices = @transform_2, window_bounds = array<i64: 1, 128>}, {pipeline_mode = #tpu.pipeline_mode<synchronous>, transform_indices = @transform_3, window_bounds = array<i64: 128, 128>}, {pipeline_mode = #tpu.pipeline_mode<synchronous>, transform_indices = @transform_4, window_bounds = array<i64: 1, 128>}, {transform_indices = @transform_5, window_bounds = array<i64: 16, 128>}]} {
    %c0 = arith.constant 0 : index
    %c0_0 = arith.constant 0 : index
    %0 = vector.load %arg1[%c0, %c0_0] : memref<16x128xf32, #tpu.memory_space<vmem>>, vector<16x128xf32>
    %c0_1 = arith.constant 0 : index
    %c0_2 = arith.constant 0 : index
    %1 = vector.load %arg2[%c0_1, %c0_2] : memref<128x128xf32, #tpu.memory_space<vmem>>, vector<128x128xf32>
    %cst = arith.constant dense<0.000000e+00> : vector<16x128xf32>
    %2 = tpu.matmul %0, %1, %cst {dimension_numbers = #tpu.dot_dimension_numbers<[1], [0], [0], [1], [0, 0, 1, 1], [], []>} : vector<16x128xf32>, vector<128x128xf32>, vector<16x128xf32> -> vector<16x128xf32>
    %c0_3 = arith.constant 0 : index
    %c0_4 = arith.constant 0 : index
    %3 = vector.load %arg3[%c0_3, %c0_4] : memref<1x128xf32, #tpu.memory_space<vmem>>, vector<1x128xf32>
    %4 = vector.broadcast %3 : vector<1x128xf32> to vector<16x128xf32>
    %5 = arith.addf %2, %4 : vector<16x128xf32>
    %cst_5 = arith.constant 0.000000e+00 : f32
    %6 = vector.broadcast %cst_5 : f32 to vector<16x128xf32>
    %7 = arith.maximumf %5, %6 : vector<16x128xf32>
    %c0_6 = arith.constant 0 : index
    %c0_7 = arith.constant 0 : index
    %8 = vector.load %arg4[%c0_6, %c0_7] : memref<128x128xf32, #tpu.memory_space<vmem>>, vector<128x128xf32>
    %cst_8 = arith.constant dense<0.000000e+00> : vector<16x128xf32>
    %9 = tpu.matmul %7, %8, %cst_8 {dimension_numbers = #tpu.dot_dimension_numbers<[1], [0], [0], [1], [0, 0, 1, 1], [], []>} : vector<16x128xf32>, vector<128x128xf32>, vector<16x128xf32> -> vector<16x128xf32>
    %c0_9 = arith.constant 0 : index
    %c0_10 = arith.constant 0 : index
    %10 = vector.load %arg5[%c0_9, %c0_10] : memref<1x128xf32, #tpu.memory_space<vmem>>, vector<1x128xf32>
    %11 = vector.broadcast %10 : vector<1x128xf32> to vector<16x128xf32>
    %12 = arith.addf %9, %11 : vector<16x128xf32>
    %c0_11 = arith.constant 0 : index
    %c0_12 = arith.constant 0 : index
    %13 = vector.load %arg6[%c0_11, %c0_12] : memref<16x128xf32, #tpu.memory_space<vmem>>, vector<16x128xf32>
    tpu.vector_store %arg6[%c0_11, %c0_12], %12 {strides = array<i32>} : memref<16x128xf32, #tpu.memory_space<vmem>>, vector<16x128xf32>,
    return
  }
  func.func @transform_0(%arg0: i32) -> (i32, i32) {
    %c0_i32 = arith.constant 0 : i32
    %c0_i32_0 = arith.constant 0 : i32
    return %arg0, %c0_i32 : i32, i32
  }
  func.func @transform_1(%arg0: i32) -> (i32, i32) {
    %c0_i32 = arith.constant 0 : i32
    %c0_i32_0 = arith.constant 0 : i32
    %c0_i32_1 = arith.constant 0 : i32
    return %c0_i32, %c0_i32_0 : i32, i32
  }
  func.func @transform_2(%arg0: i32) -> (i32, i32) {
    %c0_i32 = arith.constant 0 : i32
    %c0_i32_0 = arith.constant 0 : i32
    %c0_i32_1 = arith.constant 0 : i32
    return %c0_i32, %c0_i32_0 : i32, i32
  }
  func.func @transform_3(%arg0: i32) -> (i32, i32) {
    %c0_i32 = arith.constant 0 : i32
    %c0_i32_0 = arith.constant 0 : i32
    %c0_i32_1 = arith.constant 0 : i32
    return %c0_i32, %c0_i32_0 : i32, i32
  }
  func.func @transform_4(%arg0: i32) -> (i32, i32) {
    %c0_i32 = arith.constant 0 : i32
    %c0_i32_0 = arith.constant 0 : i32
    %c0_i32_1 = arith.constant 0 : i32
    return %c0_i32, %c0_i32_0 : i32, i32
  }
  func.func @transform_5(%arg0: i32) -> (i32, i32) {
    %c0_i32 = arith.constant 0 : i32
    %c0_i32_0 = arith.constant 0 : i32
    return %arg0, %c0_i32 : i32, i32
  }
}

</mosaic_0001>

<llo_original>
// kernel: identity_mlp.1
$region0: #{identity_mlp.1}
  #allocation0 [shape = 'u32[]', space=smem, size = 0x4, offset = 0x4, fixed_abs, tag = 'smem constant byte address 0x4 - core index']
  #allocation1 [shape = 'u32[144,128]{1,0:T(1,128)}', space=vmem, size = 0x12000, scoped, tag = 'internal scratch']
  %s0 = inlined_call_operand.vmem [shape: f32[16,128], index: 0, kind: input, shape index: {}]
  %s1 = inlined_call_operand.hbm [shape: f32[128,128], index: 1, kind: input, shape index: {}]
  %s2 = inlined_call_operand.vmem [shape: f32[1,128], index: 2, kind: input, shape index: {}]
  %s3 = inlined_call_operand.hbm [shape: f32[128,128], index: 3, kind: input, shape index: {}]
  %s4 = inlined_call_operand.vmem [shape: f32[1,128], index: 4, kind: input, shape index: {}]
  %s5 = inlined_call_operand.vmem [shape: f32[16,128], index: 5, kind: output, shape index: {}]
  %s6 = sld [smem:[#allocation0]]
  $region38: #{identity_mlp.1} parent=0
    _
  %s8 = ssub.s32 1, %s6
  %s9 = scalar_select 0, %s8, %s6
  $region1: #{identity_mlp.1} parent=0
    #allocation2 [shape = 'u8[65536]{0}', space=vmem, size = 0x10000, scoped, tag = 'input window, operand 1, single buffered']
    #allocation3 [shape = 's32[1]{0}', space=sflag, size = 0x4, scoped, tag = 'scoped memory for identity_mlp.1']
    #allocation4 [shape = 'u8[65536]{0}', space=vmem, size = 0x10000, scoped, tag = 'input window, operand 3, single buffered']
    #allocation5 [shape = 's32[1]{0}', space=sflag, size = 0x4, scoped, tag = 'scoped memory for identity_mlp.1']
    %10 = vsyncpa [#allocation3], 0
    %11 = vsyncpa [#allocation5], 0
    // Predicated region
    $region2: #{identity_mlp.1} parent=1 // pred_check
      _
    $region3: #{identity_mlp.1} parent=1 // pred_check_branch
      %13 = sbr.rel (0) target = $region5
    $region4: #{identity_mlp.1} parent=1 // pred_region
      _
    $region5: #{identity_mlp.1} parent=1 // pred_fallthru
      _
    // Predicated region
    $region6: #{identity_mlp.1} parent=1 // pred_check
      _
    $region7: #{identity_mlp.1} parent=1 // pred_check_branch
      %15 = sbr.rel (0) target = $region9
    $region8: #{identity_mlp.1} parent=1 // pred_region
      %s17 = ssub.s32 2048, 2048
      %18 = vsyncadd [#allocation3], %s17
      %s19 = sshll.u32 [#allocation2], 4
      %s20 = int_to_ptr.vmem [resolvable:$true] %s19
      %25 = dma.hbm_to_vmem [thread:$0]  %s1, 2048, %s20, [#allocation3], 128, 128, 8
    $region9: #{identity_mlp.1} parent=1 // pred_fallthru
      _
    // Predicated region
    $region10: #{identity_mlp.1} parent=1 // pred_check
      _
    $region11: #{identity_mlp.1} parent=1 // pred_check_branch
      %27 = sbr.rel (0) target = $region13
    $region12: #{identity_mlp.1} parent=1 // pred_region
      _
    $region13: #{identity_mlp.1} parent=1 // pred_fallthru
      _
    // Predicated region
    $region14: #{identity_mlp.1} parent=1 // pred_check
      _
    $region15: #{identity_mlp.1} parent=1 // pred_check_branch
      %29 = sbr.rel (0) target = $region17
    $region16: #{identity_mlp.1} parent=1 // pred_region
      %s31 = ssub.s32 2048, 2048
      %32 = vsyncadd [#allocation5], %s31
      %s33 = sshll.u32 [#allocation4], 4
      %s34 = int_to_ptr.vmem [resolvable:$true] %s33
      %39 = dma.hbm_to_vmem [thread:$0]  %s3, 2048, %s34, [#allocation5], 128, 128, 8
    $region17: #{identity_mlp.1} parent=1 // pred_fallthru
      _
    // Predicated region
    $region18: #{identity_mlp.1} parent=1 // pred_check
      _
    $region19: #{identity_mlp.1} parent=1 // pred_check_branch
      %41 = sbr.rel (0) target = $region21
    $region20: #{identity_mlp.1} parent=1 // pred_region
      _
    $region21: #{identity_mlp.1} parent=1 // pred_fallthru
      _
    // Predicated region
    $region22: #{identity_mlp.1} parent=1 // pred_check
      _
    $region23: #{identity_mlp.1} parent=1 // pred_check_branch
      %43 = sbr.rel (0) target = $region25
    $region24: #{identity_mlp.1} parent=1 // pred_region
      %44 = dma.done [#allocation3], 2048
    $region25: #{identity_mlp.1} parent=1 // pred_fallthru
      _
    // Predicated region
    $region26: #{identity_mlp.1} parent=1 // pred_check
      _
    $region27: #{identity_mlp.1} parent=1 // pred_check_branch
      %46 = sbr.rel (0) target = $region29
    $region28: #{identity_mlp.1} parent=1 // pred_region
      %47 = dma.done [#allocation5], 2048
    $region29: #{identity_mlp.1} parent=1 // pred_fallthru
      _
    %v48 = vld [vmem:[%s0] sm:$0xff]
    %v49 = vld [vmem:[%s0 + $0x8] sm:$0xff]
    %v50 = vld [vmem:[#allocation2] sm:$0xff]
    %v51 = vld [vmem:[#allocation2 + $0x8] sm:$0xff]
    %v52 = vld [vmem:[#allocation2 + $0x10] sm:$0xff]
    %v53 = vld [vmem:[#allocation2 + $0x18] sm:$0xff]
    %v54 = vld [vmem:[#allocation2 + $0x20] sm:$0xff]
    %v55 = vld [vmem:[#allocation2 + $0x28] sm:$0xff]
    %v56 = vld [vmem:[#allocation2 + $0x30] sm:$0xff]
    %v57 = vld [vmem:[#allocation2 + $0x38] sm:$0xff]
    %v58 = vld [vmem:[#allocation2 + $0x40] sm:$0xff]
    %v59 = vld [vmem:[#allocation2 + $0x48] sm:$0xff]
    %v60 = vld [vmem:[#allocation2 + $0x50] sm:$0xff]
    %v61 = vld [vmem:[#allocation2 + $0x58] sm:$0xff]
    %v62 = vld [vmem:[#allocation2 + $0x60] sm:$0xff]
    %v63 = vld [vmem:[#allocation2 + $0x68] sm:$0xff]
    %v64 = vld [vmem:[#allocation2 + $0x70] sm:$0xff]
    %v65 = vld [vmem:[#allocation2 + $0x78] sm:$0xff]
    %v66 = vld [vmem:[%s2] sm:$0x1]
    %v68 = vlaneseq
    %v69 = vshrl.u32 %v68, 7
    %v70 = vsub.s32 0, %v69
    %v71 = vrot.slane %v66, %v70
    %73 = vmatprep.subr.mxu0 0.0
    %74 = vmatpush1.msra.mxu0 %v65
    %75 = vmatprep.subr.mxu0 0.0
    %76 = vmatpush1.msra.mxu0 %v64
    %77 = vmatprep.subr.mxu0 0.0
    %78 = vmatpush1.msra.mxu0 %v63
    %79 = vmatprep.subr.mxu0 0.0
    %80 = vmatpush1.msra.mxu0 %v62
    %81 = vmatprep.subr.mxu0 0.0
    %82 = vmatpush1.msra.mxu0 %v61
    %83 = vmatprep.subr.mxu0 0.0
    %84 = vmatpush1.msra.mxu0 %v60
    %85 = vmatprep.subr.mxu0 0.0
    %86 = vmatpush1.msra.mxu0 %v59
    %87 = vmatprep.subr.mxu0 0.0
    %88 = vmatpush1.msra.mxu0 %v58
    %89 = vmatprep.subr.mxu0 0.0
    %90 = vmatpush1.msra.mxu0 %v57
    %91 = vmatprep.subr.mxu0 0.0
    %92 = vmatpush1.msra.mxu0 %v56
    %93 = vmatprep.subr.mxu0 0.0
    %94 = vmatpush1.msra.mxu0 %v55
    %95 = vmatprep.subr.mxu0 0.0
    %96 = vmatpush1.msra.mxu0 %v54
    %97 = vmatprep.subr.mxu0 0.0
    %98 = vmatpush1.msra.mxu0 %v53
    %99 = vmatprep.subr.mxu0 0.0
    %100 = vmatpush1.msra.mxu0 %v52
    %101 = vmatprep.subr.mxu0 0.0
    %102 = vmatpush1.msra.mxu0 %v51
    %103 = vmatprep.subr.mxu0 0.0
    %104 = vmatpush1.msra.mxu0 %v50
    %105 = vmatprep.subr.mxu0 0.0
    %106 = vmatpush2.msra.mxu0 0.0
    %107 = vmatprep.subr.mxu0 0.0
    %108 = vmatpush2.msra.mxu0 0.0
    %109 = vmatprep.subr.mxu0 0.0
    %110 = vmatpush2.msra.mxu0 0.0
    %111 = vmatprep.subr.mxu0 0.0
    %112 = vmatpush2.msra.mxu0 0.0
    %113 = vmatprep.subr.mxu0 0.0
    %114 = vmatpush2.msra.mxu0 0.0
    %115 = vmatprep.subr.mxu0 0.0
    %116 = vmatpush2.msra.mxu0 0.0
    %117 = vmatprep.subr.mxu0 0.0
    %118 = vmatpush2.msra.mxu0 0.0
    %119 = vmatprep.subr.mxu0 0.0
    %120 = vmatpush2.msra.mxu0 0.0
    %121 = vmatprep.subr.mxu0 0.0
    %122 = vmatpush2.msra.mxu0 0.0
    %123 = vmatprep.subr.mxu0 0.0
    %124 = vmatpush2.msra.mxu0 0.0
    %125 = vmatprep.subr.mxu0 0.0
    %126 = vmatpush2.msra.mxu0 0.0
    %127 = vmatprep.subr.mxu0 0.0
    %128 = vmatpush2.msra.mxu0 0.0
    %129 = vmatprep.subr.mxu0 0.0
    %130 = vmatpush2.msra.mxu0 0.0
    %131 = vmatprep.subr.mxu0 0.0
    %132 = vmatpush2.msra.mxu0 0.0
    %133 = vmatprep.subr.mxu0 0.0
    %134 = vmatpush2.msra.mxu0 0.0
    %135 = vmatprep.subr.mxu0 0.0
    %136 = vmatpush2.msra.mxu0 0.0
    %137 = vmatprep.mubr.f32.mxu0 0.0
    %138 = vmatmul.mubr.f32.gmra.mxu0 %v48
    %v139 = vpop.f32.mrf.mxu0
    %v140 = vadd.f32 %v71, %v139
    %v141 = vpop.f32.mrf.mxu0
    %142 = vmatprep.mubr.f32.mxu0 0.0
    %143 = vmatmul.mubr.f32.gmra.mxu0 %v49
    %v144 = vpop.f32.mrf.mxu0
    %v145 = vadd.f32 %v71, %v144
    %v146 = vpop.f32.mrf.mxu0
    %147 = vdwg.mxu0
    %v148 = vmax.f32 %v140, 0.0
    %v149 = vmax.f32 %v145, 0.0
    %v150 = vld [vmem:[#allocation4] sm:$0xff]
    %v151 = vld [vmem:[#allocation4 + $0x8] sm:$0xff]
    %v152 = vld [vmem:[#allocation4 + $0x10] sm:$0xff]
    %v153 = vld [vmem:[#allocation4 + $0x18] sm:$0xff]
    %v154 = vld [vmem:[#allocation4 + $0x20] sm:$0xff]
    %v155 = vld [vmem:[#allocation4 + $0x28] sm:$0xff]
    %v156 = vld [vmem:[#allocation4 + $0x30] sm:$0xff]
    %v157 = vld [vmem:[#allocation4 + $0x38] sm:$0xff]
    %v158 = vld [vmem:[#allocation4 + $0x40] sm:$0xff]
    %v159 = vld [vmem:[#allocation4 + $0x48] sm:$0xff]
    %v160 = vld [vmem:[#allocation4 + $0x50] sm:$0xff]
    %v161 = vld [vmem:[#allocation4 + $0x58] sm:$0xff]
    %v162 = vld [vmem:[#allocation4 + $0x60] sm:$0xff]
    %v163 = vld [vmem:[#allocation4 + $0x68] sm:$0xff]
    %v164 = vld [vmem:[#allocation4 + $0x70] sm:$0xff]
    %v165 = vld [vmem:[#allocation4 + $0x78] sm:$0xff]
    %v166 = vld [vmem:[%s4] sm:$0x1]
    %v168 = vlaneseq
    %v169 = vshrl.u32 %v168, 7
    %v170 = vsub.s32 0, %v169
    %v171 = vrot.slane %v166, %v170
    %173 = vmatprep.subr.mxu0 0.0
    %174 = vmatpush1.msra.mxu0 %v165
    %175 = vmatprep.subr.mxu0 0.0
    %176 = vmatpush1.msra.mxu0 %v164
    %177 = vmatprep.subr.mxu0 0.0
    %178 = vmatpush1.msra.mxu0 %v163
    %179 = vmatprep.subr.mxu0 0.0
    %180 = vmatpush1.msra.mxu0 %v162
    %181 = vmatprep.subr.mxu0 0.0
    %182 = vmatpush1.msra.mxu0 %v161
    %183 = vmatprep.subr.mxu0 0.0
    %184 = vmatpush1.msra.mxu0 %v160
    %185 = vmatprep.subr.mxu0 0.0
    %186 = vmatpush1.msra.mxu0 %v159
    %187 = vmatprep.subr.mxu0 0.0
    %188 = vmatpush1.msra.mxu0 %v158
    %189 = vmatprep.subr.mxu0 0.0
    %190 = vmatpush1.msra.mxu0 %v157
    %191 = vmatprep.subr.mxu0 0.0
    %192 = vmatpush1.msra.mxu0 %v156
    %193 = vmatprep.subr.mxu0 0.0
    %194 = vmatpush1.msra.mxu0 %v155
    %195 = vmatprep.subr.mxu0 0.0
    %196 = vmatpush1.msra.mxu0 %v154
    %197 = vmatprep.subr.mxu0 0.0
    %198 = vmatpush1.msra.mxu0 %v153
    %199 = vmatprep.subr.mxu0 0.0
    %200 = vmatpush1.msra.mxu0 %v152
    %201 = vmatprep.subr.mxu0 0.0
    %202 = vmatpush1.msra.mxu0 %v151
    %203 = vmatprep.subr.mxu0 0.0
    %204 = vmatpush1.msra.mxu0 %v150
    %205 = vmatprep.subr.mxu0 0.0
    %206 = vmatpush2.msra.mxu0 0.0
    %207 = vmatprep.subr.mxu0 0.0
    %208 = vmatpush2.msra.mxu0 0.0
    %209 = vmatprep.subr.mxu0 0.0
    %210 = vmatpush2.msra.mxu0 0.0
    %211 = vmatprep.subr.mxu0 0.0
    %212 = vmatpush2.msra.mxu0 0.0
    %213 = vmatprep.subr.mxu0 0.0
    %214 = vmatpush2.msra.mxu0 0.0
    %215 = vmatprep.subr.mxu0 0.0
    %216 = vmatpush2.msra.mxu0 0.0
    %217 = vmatprep.subr.mxu0 0.0
    %218 = vmatpush2.msra.mxu0 0.0
    %219 = vmatprep.subr.mxu0 0.0
    %220 = vmatpush2.msra.mxu0 0.0
    %221 = vmatprep.subr.mxu0 0.0
    %222 = vmatpush2.msra.mxu0 0.0
    %223 = vmatprep.subr.mxu0 0.0
    %224 = vmatpush2.msra.mxu0 0.0
    %225 = vmatprep.subr.mxu0 0.0
    %226 = vmatpush2.msra.mxu0 0.0
    %227 = vmatprep.subr.mxu0 0.0
    %228 = vmatpush2.msra.mxu0 0.0
    %229 = vmatprep.subr.mxu0 0.0
    %230 = vmatpush2.msra.mxu0 0.0
    %231 = vmatprep.subr.mxu0 0.0
    %232 = vmatpush2.msra.mxu0 0.0
    %233 = vmatprep.subr.mxu0 0.0
    %234 = vmatpush2.msra.mxu0 0.0
    %235 = vmatprep.subr.mxu0 0.0
    %236 = vmatpush2.msra.mxu0 0.0
    %237 = vmatprep.mubr.f32.mxu0 0.0
    %238 = vmatmul.mubr.f32.gmra.mxu0 %v148
    %v239 = vpop.f32.mrf.mxu0
    %v240 = vadd.f32 %v171, %v239
    %v241 = vpop.f32.mrf.mxu0
    %242 = vmatprep.mubr.f32.mxu0 0.0
    %243 = vmatmul.mubr.f32.gmra.mxu0 %v149
    %v244 = vpop.f32.mrf.mxu0
    %v245 = vadd.f32 %v171, %v244
    %v246 = vpop.f32.mrf.mxu0
    %247 = vdwg.mxu0
    %248 = vst [vmem:[%s5] sm:$0xff] %v240
    %249 = vst [vmem:[%s5 + $0x8] sm:$0xff] %v245
    // Predicated region
    $region30: #{identity_mlp.1} parent=1 // pred_check
      _
    $region31: #{identity_mlp.1} parent=1 // pred_check_branch
      %251 = sbr.rel (0) target = $region33
    $region32: #{identity_mlp.1} parent=1 // pred_region
      _
    $region33: #{identity_mlp.1} parent=1 // pred_fallthru
      _
    // Predicated region
    $region34: #{identity_mlp.1} parent=1 // pred_check
      _
    $region35: #{identity_mlp.1} parent=1 // pred_check_branch
      %253 = sbr.rel (0) target = $region37
    $region36: #{identity_mlp.1} parent=1 // pred_region
      _
    $region37: #{identity_mlp.1} parent=1 // pred_fallthru
      _
    %254 = vsyncpa [#allocation3], 1
    %255 = vsyncpa [#allocation5], 1

</llo_original>
